<compile_context>
chip_gen: v7x
topology: tpu7x:2x2x1
jax: 0.10.0
libtpu: 0.0.40
codegen_flags: <defaults>
</compile_context>

<pallas_src>
import jax
import jax.numpy as jnp
from jax.experimental import pallas as pl
from jax.experimental.pallas import tpu as pltpu


def _make_layernorm_kernel(C, eps):
    inv_c = 1.0 / float(C)

    def kernel(x_ref, g_ref, o_ref):
        x = x_ref[...].astype(jnp.float32)                 # (BB, C, T)
        mean = jnp.sum(x, axis=1, keepdims=True) * inv_c   # (BB, 1, T)
        d = x - mean
        var = jnp.sum(d * d, axis=1, keepdims=True) * inv_c
        y = d * jax.lax.rsqrt(var + eps)                   # (BB, C, T)
        y = y * g_ref[...]                                 # (1, C, 1) broadcast
        o_ref[...] = y.astype(o_ref.dtype)

    return kernel


def layer_norm_forward(x_nchw, g):
    """Channel-wise LayerNorm. x: (B, C, H, W); g: (1, C, 1, 1) -> (B, C, H, W)."""
    B, C, H, W = x_nchw.shape
    HW = H * W
    eps = 1e-5 if x_nchw.dtype == jnp.float32 else 1e-3

    x3 = x_nchw.reshape(B, C, HW)                       # free reshape, lanes = HW
    g3 = jnp.asarray(g, jnp.float32).reshape(1, C, 1)

    # Batch blocking: pack several samples per grid step.
    BB = next(bb for bb in (8, 4, 2, 1) if B % bb == 0)
    # Spatial tiling only for large images; keep tiles lane-dense (mult. of 128).
    if HW % 128 == 0 and HW > 4096:
        T = next(t for t in (4096, 2048, 1024, 512, 256, 128) if HW % t == 0)
    else:
        T = HW  # full-dim block is always legal

    kernel = _make_layernorm_kernel(C, eps)

    out3 = pl.pallas_call(
        kernel,
        out_shape=jax.ShapeDtypeStruct((B, C, HW), x_nchw.dtype),
        grid=(B // BB, HW // T),
        in_specs=[
            pl.BlockSpec((BB, C, T), lambda b, s: (b, 0, s)),
            pl.BlockSpec((1, C, 1), lambda b, s: (0, 0, 0)),
        ],
        out_specs=pl.BlockSpec((BB, C, T), lambda b, s: (b, 0, s)),
        compiler_params=pltpu.CompilerParams(
            dimension_semantics=("parallel", "parallel")),
    )(x3, g3)

    return out3.reshape(B, C, H, W)


def _reference(x, g):
    """Pure-JAX reference mirroring the PyTorch module (NCHW)."""
    eps = 1e-5 if x.dtype == jnp.float32 else 1e-3
    mean = jnp.mean(x, axis=1, keepdims=True)
    var = jnp.var(x, axis=1, keepdims=True)   # biased, like torch.var(unbiased=False)
    return (x - mean) * jax.lax.rsqrt(var + eps) * g


if __name__ == "__main__":
    B, dim, H, W = 2, 4, 16, 16

    key = jax.random.PRNGKey(0)
    k_x, k_g = jax.random.split(key)
    x = jax.random.normal(k_x, (B, dim, H, W), dtype=jnp.float32)
    # Parameter is initialized to ones in the module; perturb it so the scale
    # path is actually exercised by the check.
    g = 1.0 + 0.1 * jax.random.normal(k_g, (1, dim, 1, 1), dtype=jnp.float32)

    out = layer_norm_forward(x, g)
    out = jax.block_until_ready(out)

    ref = _reference(x, g)
    assert out.shape == (B, dim, H, W)
    err = float(jnp.max(jnp.abs(out - ref)))
    assert jnp.allclose(out, ref, rtol=1e-5, atol=1e-5), err

    print("KERNEL_OK")
</pallas_src>

<mosaic_0001>
module attributes {stable_mosaic.version = 11 : i64} {
  func.func @kernel(%arg0: i32, %arg1: i32, %arg2: memref<2x4x256xf32, #tpu.memory_space<vmem>>, %arg3: memref<1x4x1xf32, #tpu.memory_space<vmem>>, %arg4: memref<2x4x256xf32, #tpu.memory_space<vmem>>) attributes {dimension_semantics = [#tpu.dimension_semantics<parallel>, #tpu.dimension_semantics<parallel>], iteration_bounds = array<i64: 1, 1>, scalar_prefetch = 0 : i64, scratch_operands = 0 : i64, tpu.core_type = #tpu.core_type<tc>, window_params = [{transform_indices = @transform_0, window_bounds = array<i64: 2, 4, 256>}, {pipeline_mode = #tpu.pipeline_mode<synchronous>, transform_indices = @transform_1, window_bounds = array<i64: 1, 4, 1>}, {transform_indices = @transform_2, window_bounds = array<i64: 2, 4, 256>}]} {
    %c0 = arith.constant 0 : index
    %c0_0 = arith.constant 0 : index
    %c0_1 = arith.constant 0 : index
    %0 = vector.load %arg2[%c0, %c0_0, %c0_1] : memref<2x4x256xf32, #tpu.memory_space<vmem>>, vector<2x4x256xf32>
    %cst = arith.constant dense<0.000000e+00> : vector<2x256xf32>
    %1 = vector.multi_reduction <add>, %0, %cst [1] : vector<2x4x256xf32> to vector<2x256xf32>
    %2 = vector.shape_cast %1 : vector<2x256xf32> to vector<2x1x256xf32>
    %cst_2 = arith.constant 2.500000e-01 : f32
    %3 = vector.broadcast %cst_2 : f32 to vector<2x1x256xf32>
    %4 = arith.mulf %2, %3 : vector<2x1x256xf32>
    %5 = vector.broadcast %4 : vector<2x1x256xf32> to vector<2x4x256xf32>
    %6 = arith.subf %0, %5 : vector<2x4x256xf32>
    %7 = arith.mulf %6, %6 : vector<2x4x256xf32>
    %cst_3 = arith.constant dense<0.000000e+00> : vector<2x256xf32>
    %8 = vector.multi_reduction <add>, %7, %cst_3 [1] : vector<2x4x256xf32> to vector<2x256xf32>
    %9 = vector.shape_cast %8 : vector<2x256xf32> to vector<2x1x256xf32>
    %cst_4 = arith.constant 2.500000e-01 : f32
    %10 = vector.broadcast %cst_4 : f32 to vector<2x1x256xf32>
    %11 = arith.mulf %9, %10 : vector<2x1x256xf32>
    %cst_5 = arith.constant 9.99999974E-6 : f32
    %12 = vector.broadcast %cst_5 : f32 to vector<2x1x256xf32>
    %13 = arith.addf %11, %12 : vector<2x1x256xf32>
    %14 = math.rsqrt %13 : vector<2x1x256xf32>
    %15 = vector.broadcast %14 : vector<2x1x256xf32> to vector<2x4x256xf32>
    %16 = arith.mulf %6, %15 : vector<2x4x256xf32>
    %c0_6 = arith.constant 0 : index
    %c0_7 = arith.constant 0 : index
    %c0_8 = arith.constant 0 : index
    %17 = vector.load %arg3[%c0_6, %c0_7, %c0_8] : memref<1x4x1xf32, #tpu.memory_space<vmem>>, vector<1x4x1xf32>
    %18 = vector.broadcast %17 : vector<1x4x1xf32> to vector<2x4x256xf32>
    %19 = arith.mulf %16, %18 : vector<2x4x256xf32>
    %c0_9 = arith.constant 0 : index
    %c0_10 = arith.constant 0 : index
    %c0_11 = arith.constant 0 : index
    %20 = vector.load %arg4[%c0_9, %c0_10, %c0_11] : memref<2x4x256xf32, #tpu.memory_space<vmem>>, vector<2x4x256xf32>
    tpu.vector_store %arg4[%c0_9, %c0_10, %c0_11], %19 {strides = array<i32>} : memref<2x4x256xf32, #tpu.memory_space<vmem>>, vector<2x4x256xf32>,
    return
  }
  func.func @transform_0(%arg0: i32, %arg1: i32) -> (i32, i32, i32) {
    %c0_i32 = arith.constant 0 : i32
    %c0_i32_0 = arith.constant 0 : i32
    return %arg0, %c0_i32, %arg1 : i32, i32, i32
  }
  func.func @transform_1(%arg0: i32, %arg1: i32) -> (i32, i32, i32) {
    %c0_i32 = arith.constant 0 : i32
    %c0_i32_0 = arith.constant 0 : i32
    %c0_i32_1 = arith.constant 0 : i32
    %c0_i32_2 = arith.constant 0 : i32
    return %c0_i32, %c0_i32_0, %c0_i32_1 : i32, i32, i32
  }
  func.func @transform_2(%arg0: i32, %arg1: i32) -> (i32, i32, i32) {
    %c0_i32 = arith.constant 0 : i32
    %c0_i32_0 = arith.constant 0 : i32
    return %arg0, %c0_i32, %arg1 : i32, i32, i32
  }
}

</mosaic_0001>

<llo_original>
// kernel: tpu_custom_call.1
$region0: #{tpu_custom_call.1}
  #allocation0 [shape = 'u32[]', space=smem, size = 0x4, offset = 0x4, fixed_abs, tag = 'smem constant byte address 0x4 - core index']
  #allocation1 [shape = 'u32[144,128]{1,0:T(1,128)}', space=vmem, size = 0x12000, scoped, tag = 'internal scratch']
  %s0 = inlined_call_operand.hbm [shape: f32[2,4,256], index: 0, kind: input, shape index: {}]
  %s1 = inlined_call_operand.vmem [shape: f32[1,4,1], index: 1, kind: input, shape index: {}]
  %s2 = inlined_call_operand.hbm [shape: f32[2,4,256], index: 2, kind: output, shape index: {}]
  %s3 = sld [smem:[#allocation0]]
  $region22: #{tpu_custom_call.1} parent=0
    _
  %s5 = ssub.s32 1, %s3
  %s6 = scalar_select 0, %s5, %s3
  $region1: #{tpu_custom_call.1} parent=0
    #allocation2 [shape = 'u8[8192]{0}', space=vmem, size = 0x2000, scoped, tag = 'input window, operand 0, single buffered']
    #allocation3 [shape = 's32[1]{0}', space=sflag, size = 0x4, scoped, tag = 'scoped memory for tpu_custom_call.1']
    #allocation4 [shape = 's32[1]{0}', space=sflag, size = 0x4, scoped, tag = 'scoped memory for tpu_custom_call.1']
    #allocation5 [shape = 'u8[8192]{0}', space=vmem, size = 0x2000, scoped, tag = 'output window, operand 0, single buffered']
    %7 = vsyncpa [#allocation3], 0
    %8 = vsyncpa [#allocation4], 0
    // Predicated region
    $region2: #{tpu_custom_call.1} parent=1 // pred_check
      _
    $region3: #{tpu_custom_call.1} parent=1 // pred_check_branch
      %10 = sbr.rel (0) target = $region5
    $region4: #{tpu_custom_call.1} parent=1 // pred_region
      %s12 = ssub.s32 256, 256
      %13 = vsyncadd [#allocation3], %s12
      %s14 = sshll.u32 [#allocation2], 4
      %s15 = int_to_ptr.vmem [resolvable:$true] %s14
      %20 = dma.hbm_to_vmem [thread:$0]  %s0, 256, %s15, [#allocation3], 128, 128, 8
    $region5: #{tpu_custom_call.1} parent=1 // pred_fallthru
      _
    // Predicated region
    $region6: #{tpu_custom_call.1} parent=1 // pred_check
      _
    $region7: #{tpu_custom_call.1} parent=1 // pred_check_branch
      %22 = sbr.rel (0) target = $region9
    $region8: #{tpu_custom_call.1} parent=1 // pred_region
      _
    $region9: #{tpu_custom_call.1} parent=1 // pred_fallthru
      _
    // Predicated region
    $region10: #{tpu_custom_call.1} parent=1 // pred_check
      _
    $region11: #{tpu_custom_call.1} parent=1 // pred_check_branch
      %24 = sbr.rel (0) target = $region13
    $region12: #{tpu_custom_call.1} parent=1 // pred_region
      %25 = dma.done [#allocation3], 256
    $region13: #{tpu_custom_call.1} parent=1 // pred_fallthru
      _
    %v26 = vld [vmem:[#allocation2] sm:$0xff]
    %v27 = vld [vmem:[#allocation2 + $0x8] sm:$0xff]
    %v30 = vcombine.high %v26, %v26
    %v31 = vcombine.high %v27, %v27
    %vm34 = vcmask 1043456
    %v35 = vsel %vm34, %v26, 0.0
    %v36 = vrot.slane %v35, 4
    %v37 = vadd.f32 %v35, %v36
    %v38 = vrot.slane %v37, 2
    %v39 = vadd.f32 %v37, %v38
    %v40 = vrot.slane %v39, 1
    %v41 = vadd.f32 %v39, %v40
    %v42 = vsel %vm34, %v30, 0.0
    %v43 = vrot.slane %v42, 4
    %v44 = vadd.f32 %v42, %v43
    %v45 = vrot.slane %v44, 2
    %v46 = vadd.f32 %v44, %v45
    %v47 = vrot.slane %v46, 1
    %v48 = vadd.f32 %v46, %v47
    %v49 = vsel %vm34, %v27, 0.0
    %v50 = vrot.slane %v49, 4
    %v51 = vadd.f32 %v49, %v50
    %v52 = vrot.slane %v51, 2
    %v53 = vadd.f32 %v51, %v52
    %v54 = vrot.slane %v53, 1
    %v55 = vadd.f32 %v53, %v54
    %v56 = vsel %vm34, %v31, 0.0
    %v57 = vrot.slane %v56, 4
    %v58 = vadd.f32 %v56, %v57
    %v59 = vrot.slane %v58, 2
    %v60 = vadd.f32 %v58, %v59
    %v61 = vrot.slane %v60, 1
    %v62 = vadd.f32 %v60, %v61
    %v63 = vmul.f32 %v41, 0.25
    %v64 = vmul.f32 %v48, 0.25
    %v65 = vmul.f32 %v55, 0.25
    %v66 = vmul.f32 %v62, 0.25
    %v71 = vcombine.low %v63, %v64
    %v72 = vcombine.low %v65, %v66
    %v75 = vsub.f32 %v26, %v71
    %v76 = vsub.f32 %v27, %v72
    %v77 = vmul.f32 %v75, %v75
    %v78 = vmul.f32 %v76, %v76
    %v81 = vcombine.high %v77, %v77
    %v82 = vcombine.high %v78, %v78
    %v85 = vsel %vm34, %v77, 0.0
    %v86 = vrot.slane %v85, 4
    %v87 = vadd.f32 %v85, %v86
    %v88 = vrot.slane %v87, 2
    %v89 = vadd.f32 %v87, %v88
    %v90 = vrot.slane %v89, 1
    %v91 = vadd.f32 %v89, %v90
    %v92 = vsel %vm34, %v81, 0.0
    %v93 = vrot.slane %v92, 4
    %v94 = vadd.f32 %v92, %v93
    %v95 = vrot.slane %v94, 2
    %v96 = vadd.f32 %v94, %v95
    %v97 = vrot.slane %v96, 1
    %v98 = vadd.f32 %v96, %v97
    %v99 = vsel %vm34, %v78, 0.0
    %v100 = vrot.slane %v99, 4
    %v101 = vadd.f32 %v99, %v100
    %v102 = vrot.slane %v101, 2
    %v103 = vadd.f32 %v101, %v102
    %v104 = vrot.slane %v103, 1
    %v105 = vadd.f32 %v103, %v104
    %v106 = vsel %vm34, %v82, 0.0
    %v107 = vrot.slane %v106, 4
    %v108 = vadd.f32 %v106, %v107
    %v109 = vrot.slane %v108, 2
    %v110 = vadd.f32 %v108, %v109
    %v111 = vrot.slane %v110, 1
    %v112 = vadd.f32 %v110, %v111
    %v113 = vmul.f32 %v91, 0.25
    %v114 = vmul.f32 %v98, 0.25
    %v115 = vmul.f32 %v105, 0.25
    %v116 = vmul.f32 %v112, 0.25
    %v117 = vadd.f32 %v113, 1e-05
    %v118 = vadd.f32 %v114, 1e-05
    %v119 = vadd.f32 %v115, 1e-05
    %v120 = vadd.f32 %v116, 1e-05
    %v121 = vrsqrt.pop %v117
    %v122 = vrsqrt.pop %v118
    %v123 = vrsqrt.pop %v119
    %v124 = vrsqrt.pop %v120
    %v129 = vcombine.low %v121, %v122
    %v130 = vcombine.low %v123, %v124
    %v133 = vmul.f32 %v75, %v129
    %v134 = vmul.f32 %v76, %v130
    %v135 = vld [vmem:[%s1] sm:$0xf]
    %137 = vset.pattern.permute.xlu0 0
    %138 = vperm.xlu0 %137, %v135
    %v139 = vpop.permute.xlu0 %138
    %v141 = vunpack.c.l.s4 839922192
    %v142 = vunpack.c.0.s8 %v141
    %v143 = vlaneseq
    %v144 = vshrl.u32 %v143, 7
    %v145 = vsub.s32 %v142, %v144
    %v146 = vrot.slane %v139, %v145
    %v148 = vmul.f32 %v133, %v146
    %v149 = vmul.f32 %v134, %v146
    %150 = vst [vmem:[#allocation5] sm:$0xff] %v148
    %151 = vst [vmem:[#allocation5 + $0x8] sm:$0xff] %v149
    // Predicated region
    $region14: #{tpu_custom_call.1} parent=1 // pred_check
      _
    $region15: #{tpu_custom_call.1} parent=1 // pred_check_branch
      %153 = sbr.rel (0) target = $region17
    $region16: #{tpu_custom_call.1} parent=1 // pred_region
      %s155 = ssub.s32 256, 256
      %156 = vsyncadd [#allocation4], %s155
      %s157 = sshll.u32 [#allocation5], 4
      %s158 = int_to_ptr.vmem [resolvable:$true] %s157
      %163 = dma.vmem_to_hbm [thread:$0]  %s158, 256, %s2, [#allocation4], 128, 128, 8
    $region17: #{tpu_custom_call.1} parent=1 // pred_fallthru
      _
    // Predicated region
    $region18: #{tpu_custom_call.1} parent=1 // pred_check
      _
    $region19: #{tpu_custom_call.1} parent=1 // pred_check_branch
      %165 = sbr.rel (0) target = $region21
    $region20: #{tpu_custom_call.1} parent=1 // pred_region
      %166 = dma.done [#allocation4], 256
    $region21: #{tpu_custom_call.1} parent=1 // pred_fallthru
      _
    %167 = vsyncpa [#allocation3], 1
    %168 = vsyncpa [#allocation4], 1

</llo_original>
